<compile_context>
chip_gen: v7x
topology: tpu7x:2x2x1
jax: 0.10.0
libtpu: 0.0.40
codegen_flags: <defaults>
</compile_context>

<pallas_src>
import functools

import jax
import jax.numpy as jnp
from jax.experimental import pallas as pl
from jax.experimental.pallas import tpu as pltpu


# --------------------------------------------------------------------------
# 'translations' morphism: padded Conv2d, no bias  (lane-dense flat layout)
# --------------------------------------------------------------------------
def _conv_flat_kernel(x_ref, w_ref, o_ref, *, K, W_pad, L_o):
    # x_ref : (1, C_in, L_in)       padded image, (H,W) flattened on lanes
    # w_ref : (C_out, K*K*C_in)     weights, rows ordered (kh, kw, cin)
    # o_ref : (1, C_out, L_o)       L_o = H_out * W_pad (wide-stride flat out)
    x = x_ref[0]                                     # (C_in, L_in)
    taps = []
    for kh in range(K):                              # K*K static lane-offset slices
        for kw in range(K):
            off = kh * W_pad + kw
            taps.append(jax.lax.slice_in_dim(x, off, off + L_o, axis=1))
    patches = jnp.concatenate(taps, axis=0)          # (K*K*C_in, L_o) im2col
    # Single deep MXU matmul: (C_out, K*K*C_in) @ (K*K*C_in, L_o)
    o_ref[0] = jnp.dot(w_ref[...], patches,
                       preferred_element_type=jnp.float32).astype(o_ref.dtype)


def conv2d_pad_pallas(x_nchw, w_oihw):
    """Conv2d with padding = (k//2, k//2), stride 1, no bias.  NCHW in/out."""
    N, C_in, H, W = x_nchw.shape
    C_out, C_in_w, KH, KW = w_oihw.shape
    assert C_in == C_in_w and KH == KW
    K = KH
    p = K // 2
    H_pad, W_pad = H + 2 * p, W + 2 * p
    H_out = H_pad - K + 1
    W_out = W_pad - K + 1
    L_o = H_out * W_pad                      # wide-stride flat output length
    L_in = (H_pad + 1) * W_pad               # +1 zero row: slack for tap slices

    # Zero-pad spatially (same as torch Conv2d padding) + one extra bottom row,
    # then flatten (H,W) -> lane axis.  Contiguous reshape: no transpose pass.
    x_pad = jnp.pad(x_nchw, ((0, 0), (0, 0), (p, p + 1), (p, p)))
    x_flat = x_pad.reshape(N, C_in, L_in)

    # (O,I,KH,KW) -> (O,KH,KW,I) -> (O, K*K*I), matching im2col row order.
    w2 = jnp.transpose(w_oihw, (0, 2, 3, 1)).reshape(C_out, K * K * C_in)

    kernel = functools.partial(_conv_flat_kernel, K=K, W_pad=W_pad, L_o=L_o)

    out_flat = pl.pallas_call(
        kernel,
        out_shape=jax.ShapeDtypeStruct((N, C_out, L_o), x_nchw.dtype),
        grid_spec=pltpu.PrefetchScalarGridSpec(
            num_scalar_prefetch=0,
            grid=(N,),
            in_specs=[
                pl.BlockSpec((1, C_in, L_in), lambda n: (n, 0, 0)),
                pl.BlockSpec((C_out, K * K * C_in), lambda n: (0, 0)),
            ],
            out_specs=pl.BlockSpec((1, C_out, L_o), lambda n: (n, 0, 0)),
        ),
        compiler_params=pltpu.CompilerParams(
            dimension_semantics=("parallel",)),
    )(x_flat, w2)

    # Rows are strided by W_pad: free contiguous reshape, then drop the 2p
    # wrap columns.  Output is already NCHW — no transpose.
    out = out_flat.reshape(N, C_out, H_out, W_pad)[:, :, :, :W_out]
    return out


# --------------------------------------------------------------------------
# 'identity' morphism: flatten + Linear (no bias), F-tiled with accumulator
# --------------------------------------------------------------------------
def _linear_kernel(x_ref, w_ref, o_ref, acc_ref):
    # x_ref : (N, TF), w_ref : (out_f, TF), o_ref/acc_ref : (N, out_f)
    @pl.when(pl.program_id(0) == 0)
    def _init():
        acc_ref[...] = jnp.zeros_like(acc_ref)

    # Contract against W (out,in) directly (transposed-RHS matmul on the MXU);
    # no wrapper-side weight transpose pass.
    acc_ref[...] += jax.lax.dot_general(
        x_ref[...], w_ref[...],
        dimension_numbers=(((1,), (1,)), ((), ())),
        preferred_element_type=jnp.float32)

    @pl.when(pl.program_id(0) == pl.num_programs(0) - 1)
    def _finalize():
        o_ref[...] = acc_ref[...].astype(o_ref.dtype)


def linear_no_bias_pallas(x, w_out_in, *, tf=512):
    """y = flatten(x) @ W.T  where W has shape (out_features, in_features)."""
    N = x.shape[0]
    x2d = x.reshape(N, -1)
    F = x2d.shape[1]
    out_f = w_out_in.shape[0]

    tf = min(tf, F)
    num_k = pl.cdiv(F, tf)
    F_padded = num_k * tf
    if F_padded != F:                      # zero-pad reduction dim (no effect)
        x2d = jnp.pad(x2d, ((0, 0), (0, F_padded - F)))
        w_out_in = jnp.pad(w_out_in, ((0, 0), (0, F_padded - F)))

    return pl.pallas_call(
        _linear_kernel,
        out_shape=jax.ShapeDtypeStruct((N, out_f), x.dtype),
        grid_spec=pltpu.PrefetchScalarGridSpec(
            num_scalar_prefetch=0,
            grid=(num_k,),
            in_specs=[
                pl.BlockSpec((N, tf), lambda k: (0, k)),
                pl.BlockSpec((out_f, tf), lambda k: (0, k)),
            ],
            out_specs=pl.BlockSpec((N, out_f), lambda k: (0, 0)),
            scratch_shapes=[pltpu.VMEM((N, out_f), jnp.float32)],
        ),
        compiler_params=pltpu.CompilerParams(
            dimension_semantics=("arbitrary",)),
    )(x2d, w_out_in)


# --------------------------------------------------------------------------
# Morphism wrapper (forward pass only; pruning / weight-norm bookkeeping is
# host-side module state, not part of forward)
# --------------------------------------------------------------------------
class MorphismPallas:
    def __init__(self, in_ch, out_ch, kernel_size=None,
                 equivariance="translations", seed=0):
        self.in_ch = in_ch
        self.out_ch = out_ch
        self.kernel_size = kernel_size
        self.equivariance = equivariance
        key = jax.random.PRNGKey(seed)
        if equivariance == "identity":
            # nn.Linear weight shape: (out_features, in_features)
            self.weight = 0.05 * jax.random.normal(
                key, (out_ch, in_ch), dtype=jnp.float32)
        else:
            # nn.Conv2d weight shape: (out_ch, in_ch, K, K)
            self.weight = 0.05 * jax.random.normal(
                key, (out_ch, in_ch, kernel_size, kernel_size),
                dtype=jnp.float32)

    def __call__(self, inputs):
        if self.equivariance == "identity":
            return linear_no_bias_pallas(inputs, self.weight)
        return conv2d_pad_pallas(inputs, self.weight)


if __name__ == "__main__":
    key = jax.random.PRNGKey(0)
    kx, kl = jax.random.split(key)

    # ---- translations morphism (default): NCHW conv with same padding ----
    N, C_in, H, W = 2, 4, 16, 16
    C_out, K = 8, 3
    x = jax.random.normal(kx, (N, C_in, H, W), dtype=jnp.float32)

    morph_conv = MorphismPallas(C_in, C_out, kernel_size=K,
                                equivariance="translations", seed=1)
    y_conv = jax.block_until_ready(morph_conv(x))

    # pure-JAX reference check
    y_ref = jax.lax.conv_general_dilated(
        x, morph_conv.weight, window_strides=(1, 1),
        padding=[(K // 2, K // 2), (K // 2, K // 2)],
        dimension_numbers=("NCHW", "OIHW", "NCHW"))
    assert y_conv.shape == (N, C_out, H, W)
    assert jnp.allclose(y_conv, y_ref, atol=1e-4, rtol=1e-4)

    # ---- identity morphism: flatten + linear, no bias ----
    feat = C_in * H * W
    morph_lin = MorphismPallas(feat, 32, equivariance="identity", seed=2)
    y_lin = jax.block_until_ready(morph_lin(x))
    y_lin_ref = x.reshape(N, -1) @ morph_lin.weight.T
    assert y_lin.shape == (N, 32)
    assert jnp.allclose(y_lin, y_lin_ref, atol=1e-4, rtol=1e-4)

    print("KERNEL_OK")
</pallas_src>

<mosaic_0001>
module attributes {stable_mosaic.version = 11 : i64} {
  func.func @_conv_flat_kernel(%arg0: i32, %arg1: memref<1x4x342xf32, #tpu.memory_space<vmem>>, %arg2: memref<8x36xf32, #tpu.memory_space<vmem>>, %arg3: memref<1x8x288xf32, #tpu.memory_space<vmem>>) attributes {dimension_semantics = [#tpu.dimension_semantics<parallel>], iteration_bounds = array<i64: 2>, scalar_prefetch = 0 : i64, scratch_operands = 0 : i64, tpu.core_type = #tpu.core_type<tc>, window_params = [{transform_indices = @transform_0, window_bounds = array<i64: 1, 4, 342>}, {pipeline_mode = #tpu.pipeline_mode<synchronous>, transform_indices = @transform_1, window_bounds = array<i64: 8, 36>}, {transform_indices = @transform_2, window_bounds = array<i64: 1, 8, 288>}]} {
    %c0 = arith.constant 0 : index
    %c0_0 = arith.constant 0 : index
    %c0_1 = arith.constant 0 : index
    %0 = vector.load %arg1[%c0, %c0_0, %c0_1] : memref<1x4x342xf32, #tpu.memory_space<vmem>>, vector<1x4x342xf32>
    %1 = vector.shape_cast %0 : vector<1x4x342xf32> to vector<4x342xf32>
    %2 = vector.extract_strided_slice %1 {offsets = [0, 0], sizes = [4, 288], strides = [1, 1]} : vector<4x342xf32> to vector<4x288xf32>
    %3 = vector.extract_strided_slice %1 {offsets = [0, 1], sizes = [4, 288], strides = [1, 1]} : vector<4x342xf32> to vector<4x288xf32>
    %4 = vector.extract_strided_slice %1 {offsets = [0, 2], sizes = [4, 288], strides = [1, 1]} : vector<4x342xf32> to vector<4x288xf32>
    %5 = vector.extract_strided_slice %1 {offsets = [0, 18], sizes = [4, 288], strides = [1, 1]} : vector<4x342xf32> to vector<4x288xf32>
    %6 = vector.extract_strided_slice %1 {offsets = [0, 19], sizes = [4, 288], strides = [1, 1]} : vector<4x342xf32> to vector<4x288xf32>
    %7 = vector.extract_strided_slice %1 {offsets = [0, 20], sizes = [4, 288], strides = [1, 1]} : vector<4x342xf32> to vector<4x288xf32>
    %8 = vector.extract_strided_slice %1 {offsets = [0, 36], sizes = [4, 288], strides = [1, 1]} : vector<4x342xf32> to vector<4x288xf32>
    %9 = vector.extract_strided_slice %1 {offsets = [0, 37], sizes = [4, 288], strides = [1, 1]} : vector<4x342xf32> to vector<4x288xf32>
    %10 = vector.extract_strided_slice %1 {offsets = [0, 38], sizes = [4, 288], strides = [1, 1]} : vector<4x342xf32> to vector<4x288xf32>
    %11 = tpu.concatenate %2, %3, %4, %5, %6, %7, %8, %9, %10 in 0 : vector<4x288xf32>, vector<4x288xf32>, vector<4x288xf32>, vector<4x288xf32>, vector<4x288xf32>, vector<4x288xf32>, vector<4x288xf32>, vector<4x288xf32>, vector<4x288xf32> -> vector<36x288xf32>
    %c0_2 = arith.constant 0 : index
    %c0_3 = arith.constant 0 : index
    %12 = vector.load %arg2[%c0_2, %c0_3] : memref<8x36xf32, #tpu.memory_space<vmem>>, vector<8x36xf32>
    %cst = arith.constant dense<0.000000e+00> : vector<8x288xf32>
    %13 = tpu.matmul %12, %11, %cst {dimension_numbers = #tpu.dot_dimension_numbers<[1], [0], [0], [1], [0, 0, 1, 1], [], []>} : vector<8x36xf32>, vector<36x288xf32>, vector<8x288xf32> -> vector<8x288xf32>
    %c0_4 = arith.constant 0 : index
    %c0_5 = arith.constant 0 : index
    %c0_6 = arith.constant 0 : index
    %14 = vector.load %arg3[%c0_4, %c0_5, %c0_6] : memref<1x8x288xf32, #tpu.memory_space<vmem>>, vector<1x8x288xf32>
    %15 = vector.shape_cast %14 : vector<1x8x288xf32> to vector<8x288xf32>
    %16 = vector.shape_cast %13 : vector<8x288xf32> to vector<1x8x288xf32>
    tpu.vector_store %arg3[%c0_4, %c0_5, %c0_6], %16 {strides = array<i32>} : memref<1x8x288xf32, #tpu.memory_space<vmem>>, vector<1x8x288xf32>,
    return
  }
  func.func @transform_0(%arg0: i32) -> (i32, i32, i32) {
    %c0_i32 = arith.constant 0 : i32
    %c0_i32_0 = arith.constant 0 : i32
    %c0_i32_1 = arith.constant 0 : i32
    return %arg0, %c0_i32, %c0_i32_0 : i32, i32, i32
  }
  func.func @transform_1(%arg0: i32) -> (i32, i32) {
    %c0_i32 = arith.constant 0 : i32
    %c0_i32_0 = arith.constant 0 : i32
    %c0_i32_1 = arith.constant 0 : i32
    return %c0_i32, %c0_i32_0 : i32, i32
  }
  func.func @transform_2(%arg0: i32) -> (i32, i32, i32) {
    %c0_i32 = arith.constant 0 : i32
    %c0_i32_0 = arith.constant 0 : i32
    %c0_i32_1 = arith.constant 0 : i32
    return %arg0, %c0_i32, %c0_i32_0 : i32, i32, i32
  }
}

</mosaic_0001>

<llo_original>
// kernel: tpu_custom_call.1
$region0: #{tpu_custom_call.1}
  #allocation0 [shape = 'u32[]', space=smem, size = 0x4, offset = 0x4, fixed_abs, tag = 'smem constant byte address 0x4 - core index']
  #allocation1 [shape = 'u32[144,128]{1,0:T(1,128)}', space=vmem, size = 0x12000, scoped, tag = 'internal scratch']
  %s0 = inlined_call_operand.hbm [shape: f32[2,4,342], index: 0, kind: input, shape index: {}]
  %s1 = inlined_call_operand.hbm [shape: f32[8,36], index: 1, kind: input, shape index: {}]
  %s2 = inlined_call_operand.hbm [shape: f32[2,8,288], index: 2, kind: output, shape index: {}]
  %s3 = sld [smem:[#allocation0]]
  $region49: #{tpu_custom_call.1} parent=0
    _
  %s5 = ssub.s32 1, %s3
  %s6 = scalar_select 0, %s5, %s3
  $region1: #{tpu_custom_call.1} parent=0
    #allocation2 [shape = 'u8[12288]{0}', space=vmem, size = 0x3000, scoped, tag = 'input window, operand 0']
    #allocation3 [shape = 's32[2]{0}', space=sflag, size = 0x8, scoped, tag = 'scoped memory for tpu_custom_call.1']
    #allocation4 [shape = 's32[2]{0}', space=sflag, size = 0x8, scoped, tag = 'scoped memory for tpu_custom_call.1']
    #allocation5 [shape = 'u8[4096]{0}', space=vmem, size = 0x1000, scoped, tag = 'input window, operand 1, single buffered']
    #allocation6 [shape = 's32[1]{0}', space=sflag, size = 0x4, scoped, tag = 'scoped memory for tpu_custom_call.1']
    #allocation7 [shape = 'u8[24576]{0}', space=vmem, size = 0x6000, scoped, tag = 'output window, operand 0']
    %7 = vsyncpa [#allocation3], 0
    %s8 = scalar_lea.sflag [#allocation3], 1
    %9 = vsyncpa %s8, 0
    %10 = vsyncpa [#allocation6], 0
    %11 = vsyncpa [#allocation4], 0
    %s12 = scalar_lea.sflag [#allocation4], 1
    %13 = vsyncpa %s12, 0
    loop: start=0, step=1, limit=4
    $region2: #{tpu_custom_call.1} parent=1 // loop_pre_header
      _
    $region3: #{tpu_custom_call.1} parent=1 // loop_header
      %s15 = sphi 0, %s19
      %p16 = scmp.ge.s32.totalorder %s15, 4
      %s25 = sphi 0, %s27
      %s28 = sphi 0, %s25
      %s29 = sphi 0, %s28
      %s45 = sphi 0, %s29
      %s49 = sphi 0, %s49
      %s51 = sphi 0, %s49
      %s52 = sphi 0, %s51
      %s66 = sphi 0, %s52
      %s72 = sphi 0, %s74
      %s75 = sphi 0, %s72
      %s76 = sphi 0, %s75
      %s92 = sphi 0, %s76
    $region4: #{tpu_custom_call.1} parent=1 // loop_header_branch
      %18 = sbr.rel (%p16) target = $region8
    $region5: #{tpu_custom_call.1} parent=1 // loop_body
      %s20 = ssub.s32 %s15, 1
      %s21 = ssub.s32 %s15, 2
      %s22 = sadd.s32 %s15, 1
      %s23 = ssub.s32 %s15, %s22
      %p24 = scmp.eq.s32.totalorder %s23, 0
      %s26 = sadd.s32 %s25, 1
      %s27 = scalar_select %p24, %s25, %s26
      %p30 = pneg %p24
      %p31 = scmp.eq.s32.totalorder %s15, 1
      %p32 = por %p30, %p31
      %p33 = scmp.ne.s32.totalorder %s25, %s28
      %p34 = scmp.eq.s32.totalorder %s15, 0
      %p35 = por %p33, %p34
      %p36 = scmp.ne.s32.totalorder %s25, %s28
      %p37 = scmp.eq.s32.totalorder %s20, 1
      %p38 = por %p36, %p37
      %p39 = scmp.ne.s32.totalorder %s28, %s29
      %p40 = scmp.eq.s32.totalorder %s20, 0
      %p41 = por %p39, %p40
      %p42 = scmp.ne.s32.totalorder %s28, %s29
      %p43 = scmp.eq.s32.totalorder %s21, 1
      %p44 = por %p42, %p43
      %p46 = scmp.ne.s32.totalorder %s29, %s45
      %p47 = scmp.eq.s32.totalorder %s21, 0
      %p48 = por %p46, %p47
      %s50 = sadd.s32 %s49, 1
      %p53 = scmp.eq.s32.totalorder %s15, 1
      %p54 = scmp.ne.s32.totalorder %s49, %s51
      %p55 = scmp.eq.s32.totalorder %s15, 0
      %p56 = por %p54, %p55
      %p57 = scmp.ne.s32.totalorder %s49, %s51
      %p58 = scmp.eq.s32.totalorder %s20, 1
      %p59 = por %p57, %p58
      %p60 = scmp.ne.s32.totalorder %s51, %s52
      %p61 = scmp.eq.s32.totalorder %s20, 0
      %p62 = por %p60, %p61
      %p63 = scmp.ne.s32.totalorder %s51, %s52
      %p64 = scmp.eq.s32.totalorder %s21, 1
      %p65 = por %p63, %p64
      %p67 = scmp.ne.s32.totalorder %s52, %s66
      %p68 = scmp.eq.s32.totalorder %s21, 0
      %p69 = por %p67, %p68
      %s70 = ssub.s32 %s15, %s22
      %p71 = scmp.eq.s32.totalorder %s70, 0
      %s73 = sadd.s32 %s72, 1
      %s74 = scalar_select %p71, %s72, %s73
      %p77 = pneg %p71
      %p78 = scmp.eq.s32.totalorder %s15, 1
      %p79 = por %p77, %p78
      %p80 = scmp.ne.s32.totalorder %s72, %s75
      %p81 = scmp.eq.s32.totalorder %s15, 0
      %p82 = por %p80, %p81
      %p83 = scmp.ne.s32.totalorder %s72, %s75
      %p84 = scmp.eq.s32.totalorder %s20, 1
      %p85 = por %p83, %p84
      %p86 = scmp.ne.s32.totalorder %s75, %s76
      %p87 = scmp.eq.s32.totalorder %s20, 0
      %p88 = por %p86, %p87
      %p89 = scmp.ne.s32.totalorder %s75, %s76
      %p90 = scmp.eq.s32.totalorder %s21, 1
      %p91 = por %p89, %p90
      %p93 = scmp.ne.s32.totalorder %s76, %s92
      %p94 = scmp.eq.s32.totalorder %s21, 0
      %p95 = por %p93, %p94
      %p96 = scmp.le.s32.totalorder 1, %s15
      %p97 = scmp.lt.s32.totalorder %s15, 3
      %p98 = pnand %p96, %p97
      %p99 = pneg %p98
      // Predicated region
      $region9: #{tpu_custom_call.1} parent=5 // pred_check
        _
      $region10: #{tpu_custom_call.1} parent=5 // pred_check_branch
        %101 = sbr.rel (%p98) target = $region12
      $region11: #{tpu_custom_call.1} parent=5 // pred_region
        %s102 = ssub.s32 %s15, 1
        // Predicated region
        $region13: #{tpu_custom_call.1} parent=11 // pred_check
          %p103 = pneg %p62
        $region14: #{tpu_custom_call.1} parent=11 // pred_check_branch
          %105 = sbr.rel (%p103) target = $region16
        $region15: #{tpu_custom_call.1} parent=11 // pred_region
          %s107 = ssub.s32 128, 128
          %108 = vsyncadd [#allocation6], %s107
          %s110 = sshll.u32 [#allocation5], 4
          %s111 = int_to_ptr.vmem [resolvable:$true] %s110
          %113 = dma.hbm_to_vmem [thread:$0]  %s1, 128, %s111, [#allocation6]
        $region16: #{tpu_custom_call.1} parent=11 // pred_fallthru
          _
      $region12: #{tpu_custom_call.1} parent=5 // pred_fallthru
        _
      %p114 = scmp.lt.s32.totalorder %s15, 2
      // Predicated region
      $region17: #{tpu_custom_call.1} parent=5 // pred_check
        %p115 = pneg %p114
      $region18: #{tpu_custom_call.1} parent=5 // pred_check_branch
        %117 = sbr.rel (%p115) target = $region20
      $region19: #{tpu_custom_call.1} parent=5 // pred_region
        // Predicated region
        $region21: #{tpu_custom_call.1} parent=19 // pred_check
          %p118 = pneg %p35
        $region22: #{tpu_custom_call.1} parent=19 // pred_check_branch
          %120 = sbr.rel (%p118) target = $region24
        $region23: #{tpu_custom_call.1} parent=19 // pred_region
          %s121 = sand.u32 %s25, 1
          %s122 = scalar_lea.sflag [#allocation3], %s121
          %s123 = sand.u32 %s25, 1
          %s124 = smul.addr %s123, 12
          %s125 = scalar_lea.vmem [#allocation2], %s124
          %s127 = ssub.s32 192, 192
          %128 = vsyncadd %s122, %s127
          %s129 = smul.addr %s15, 3
          %s130 = smul.addr %s129, 64
          %s131 = scalar_lea.hbm %s0, %s130
          %s133 = sshll.u32 %s125, 4
          %s134 = int_to_ptr.vmem [resolvable:$true] %s133
          %136 = dma.hbm_to_vmem [thread:$0]  %s131, 192, %s134, %s122
        $region24: #{tpu_custom_call.1} parent=19 // pred_fallthru
          _
      $region20: #{tpu_custom_call.1} parent=5 // pred_fallthru
        _
      %p137 = scmp.le.s32.totalorder 1, %s15
      %p138 = scmp.lt.s32.totalorder %s15, 3
      %p139 = pnand %p137, %p138
      %p140 = pneg %p139
      // Predicated region
      $region25: #{tpu_custom_call.1} parent=5 // pred_check
        _
      $region26: #{tpu_custom_call.1} parent=5 // pred_check_branch
        %142 = sbr.rel (%p139) target = $region28
      $region27: #{tpu_custom_call.1} parent=5 // pred_region
        %s143 = ssub.s32 %s15, 1
        %s144 = sand.u32 %s28, 1
        %s145 = scalar_lea.sflag [#allocation3], %s144
        %s146 = sand.u32 %s28, 1
        %s147 = smul.addr %s146, 12
        %s148 = scalar_lea.vmem [#allocation2], %s147
        // Predicated region
        $region29: #{tpu_custom_call.1} parent=27 // pred_check
          %p149 = pneg %p41
        $region30: #{tpu_custom_call.1} parent=27 // pred_check_branch
          %151 = sbr.rel (%p149) target = $region32
        $region31: #{tpu_custom_call.1} parent=27 // pred_region
          %152 = dma.done %s145, 192
        $region32: #{tpu_custom_call.1} parent=27 // pred_fallthru
          _
        // Predicated region
        $region33: #{tpu_custom_call.1} parent=27 // pred_check
          %p153 = pneg %p62
        $region34: #{tpu_custom_call.1} parent=27 // pred_check_branch
          %155 = sbr.rel (%p153) target = $region36
        $region35: #{tpu_custom_call.1} parent=27 // pred_region
          %156 = dma.done [#allocation6], 128
        $region36: #{tpu_custom_call.1} parent=27 // pred_fallthru
          _
        %s157 = sand.u32 %s28, 1
        %s158 = scalar_lea.sflag [#allocation3], %s157
        %s159 = sand.u32 %s28, 1
        %s160 = smul.addr %s159, 12
        %s161 = scalar_lea.vmem [#allocation2], %s160
        %p162 = pneg %p41
        %p163 = pneg %p38
        %p164 = pneg %p62
        %p165 = pneg %p59
        %p166 = pneg %p88
        %p167 = pneg %p85
        %s168 = sand.u32 %s75, 1
        %s169 = scalar_lea.sflag [#allocation4], %s168
        %s170 = sand.u32 %s75, 1
        %s171 = smul.addr %s170, 24
        %s172 = scalar_lea.vmem [#allocation7], %s171
        %v173 = vld [vmem:[%s148] sm:$0xff]
        %v174 = vld [vmem:[%s148 + $0x8] sm:$0xf]
        %v177 = vcombine.high %v173, %v173
        %v179 = vcombine.low %v173, %v173
        %v180 = vcombine.low %v174, %v174
        %181 = vrot.lane.b32.xlu0 %v179, 127
        %v182 = vpop.permute.xlu0 %181
        %183 = vrot.lane.b32.xlu0 %v173, 127
        %v184 = vpop.permute.xlu0 %183
        %185 = vrot.lane.b32.xlu0 %v180, 127
        %v186 = vpop.permute.xlu0 %185
        %vm187 = vcmask 1039360
        %v188 = vsel %vm187, %v182, %v184
        %v189 = vsel %vm187, %v184, %v186
        %193 = vrot.lane.b32.xlu0 %v173, 126
        %v194 = vpop.permute.xlu0 %193
        %195 = vrot.lane.b32.xlu0 %v177, 126
        %v196 = vpop.permute.xlu0 %195
        %197 = vrot.lane.b32.xlu0 %v174, 126
        %v198 = vpop.permute.xlu0 %197
        %vm199 = vcmask 1031168
        %v200 = vsel %vm199, %v194, %v196
        %v201 = vsel %vm199, %v196, %v198
        %205 = vrot.lane.b32.xlu0 %v179, 110
        %v206 = vpop.permute.xlu0 %205
        %207 = vrot.lane.b32.xlu0 %v173, 110
        %v208 = vpop.permute.xlu0 %207
        %209 = vrot.lane.b32.xlu0 %v180, 110
        %v210 = vpop.permute.xlu0 %209
        %vm211 = vcmask 900096
        %v212 = vsel %vm211, %v206, %v208
        %v213 = vsel %vm211, %v208, %v210
        %217 = vrot.lane.b32.xlu0 %v173, 109
        %v218 = vpop.permute.xlu0 %217
        %219 = vrot.lane.b32.xlu0 %v177, 109
        %v220 = vpop.permute.xlu0 %219
        %221 = vrot.lane.b32.xlu0 %v174, 109
        %v222 = vpop.permute.xlu0 %221
        %vm223 = vcmask 891904
        %v224 = vsel %vm223, %v218, %v220
        %v225 = vsel %vm223, %v220, %v222
        %229 = vrot.lane.b32.xlu0 %v179, 108
        %v230 = vpop.permute.xlu0 %229
        %231 = vrot.lane.b32.xlu0 %v173, 108
        %v232 = vpop.permute.xlu0 %231
        %233 = vrot.lane.b32.xlu0 %v180, 108
        %v234 = vpop.permute.xlu0 %233
        %vm235 = vcmask 883712
        %v236 = vsel %vm235, %v230, %v232
        %v237 = vsel %vm235, %v232, %v234
        %241 = vrot.lane.b32.xlu0 %v173, 92
        %v242 = vpop.permute.xlu0 %241
        %243 = vrot.lane.b32.xlu0 %v177, 92
        %v244 = vpop.permute.xlu0 %243
        %245 = vrot.lane.b32.xlu0 %v174, 92
        %v246 = vpop.permute.xlu0 %245
        %vm247 = vcmask 752640
        %v248 = vsel %vm247, %v242, %v244
        %v249 = vsel %vm247, %v244, %v246
        %253 = vrot.lane.b32.xlu0 %v179, 91
        %v254 = vpop.permute.xlu0 %253
        %255 = vrot.lane.b32.xlu0 %v173, 91
        %v256 = vpop.permute.xlu0 %255
        %257 = vrot.lane.b32.xlu0 %v180, 91
        %v258 = vpop.permute.xlu0 %257
        %vm259 = vcmask 744448
        %v260 = vsel %vm259, %v254, %v256
        %v261 = vsel %vm259, %v256, %v258
        %265 = vrot.lane.b32.xlu0 %v173, 90
        %v266 = vpop.permute.xlu0 %265
        %267 = vrot.lane.b32.xlu0 %v177, 90
        %v268 = vpop.permute.xlu0 %267
        %269 = vrot.lane.b32.xlu0 %v174, 90
        %v270 = vpop.permute.xlu0 %269
        %vm271 = vcmask 736256
        %v272 = vsel %vm271, %v266, %v268
        %v273 = vsel %vm271, %v268, %v270
        %vm274 = vcmask 1043456
        %v275 = vsel %vm274, %v173, %v188
        %v276 = vsel %vm274, %v177, %v189
        %v277 = vsel %vm274, %v174, %v186
        %v278 = vsel %vm274, %v200, %v212
        %v279 = vsel %vm274, %v201, %v213
        %v280 = vsel %vm274, %v198, %v210
        %v281 = vsel %vm274, %v224, %v236
        %v282 = vsel %vm274, %v225, %v237
        %v283 = vsel %vm274, %v222, %v234
        %v284 = vsel %vm274, %v248, %v260
        %v285 = vsel %vm274, %v249, %v261
        %v286 = vsel %vm274, %v246, %v258
        %v287 = vld [vmem:[#allocation5] sm:$0xff]
        %vm288 = vcmask 293888
        %v290 = vsel %vm288, %v287, 0
        %v292 = vsel %vm274, %v272, 0
        %v294 = vsel %vm274, %v273, 0
        %v296 = vsel %vm274, %v270, 0
        %298 = vmatprep.subr.mxu0 %v276
        %299 = vmatpush1.msra.mxu0 %v275
        %300 = vmatprep.subr.mxu0 %v279
        %301 = vmatpush1.msra.mxu0 %v278
        %302 = vmatprep.subr.mxu0 %v282
        %303 = vmatpush1.msra.mxu0 %v281
        %304 = vmatprep.subr.mxu0 %v285
        %305 = vmatpush1.msra.mxu0 %v284
        %306 = vmatprep.subr.mxu0 %v294
        %307 = vmatpush1.msra.mxu0 %v292
        %308 = vmatprep.subr.mxu0 0.0
        %309 = vmatpush1.msra.mxu0 0.0
        %310 = vmatprep.subr.mxu0 0.0
        %311 = vmatpush1.msra.mxu0 0.0
        %312 = vmatprep.subr.mxu0 0.0
        %313 = vmatpush1.msra.mxu0 0.0
        %314 = vmatprep.subr.mxu0 0.0
        %315 = vmatpush1.msra.mxu0 0.0
        %316 = vmatprep.subr.mxu0 0.0
        %317 = vmatpush1.msra.mxu0 0.0
        %318 = vmatprep.subr.mxu0 0.0
        %319 = vmatpush1.msra.mxu0 0.0
        %320 = vmatprep.subr.mxu0 0.0
        %321 = vmatpush1.msra.mxu0 0.0
        %322 = vmatprep.subr.mxu0 0.0
        %323 = vmatpush1.msra.mxu0 0.0
        %324 = vmatprep.subr.mxu0 0.0
        %325 = vmatpush1.msra.mxu0 0.0
        %326 = vmatprep.subr.mxu0 0.0
        %327 = vmatpush1.msra.mxu0 0.0
        %328 = vmatprep.subr.mxu0 0.0
        %329 = vmatpush1.msra.mxu0 0.0
        %330 = vmatprep.subr.mxu0 0.0
        %331 = vmatpush1.msra.mxu0 0.0
        %332 = vmatprep.subr.mxu0 0.0
        %333 = vmatpush1.msra.mxu0 0.0
        %334 = vmatprep.subr.mxu0 0.0
        %335 = vmatpush1.msra.mxu0 0.0
        %336 = vmatprep.subr.mxu0 0.0
        %337 = vmatpush1.msra.mxu0 0.0
        %338 = vmatprep.subr.mxu0 0.0
        %339 = vmatpush1.msra.mxu0 0.0
        %340 = vmatprep.subr.mxu0 0.0
        %341 = vmatpush1.msra.mxu0 0.0
        %342 = vmatprep.subr.mxu0 0.0
        %343 = vmatpush1.msra.mxu0 0.0
        %344 = vmatprep.subr.mxu0 0.0
        %345 = vmatpush1.msra.mxu0 0.0
        %346 = vmatprep.subr.mxu0 0.0
        %347 = vmatpush1.msra.mxu0 0.0
        %348 = vmatprep.subr.mxu0 0.0
        %349 = vmatpush1.msra.mxu0 0.0
        %350 = vmatprep.subr.mxu0 0.0
        %351 = vmatpush1.msra.mxu0 0.0
        %352 = vmatprep.subr.mxu0 0.0
        %353 = vmatpush1.msra.mxu0 0.0
        %354 = vmatprep.subr.mxu0 0.0
        %355 = vmatpush1.msra.mxu0 0.0
        %356 = vmatprep.subr.mxu0 0.0
        %357 = vmatpush1.msra.mxu0 0.0
        %358 = vmatprep.subr.mxu0 0.0
        %359 = vmatpush1.msra.mxu0 0.0
        %360 = vmatprep.subr.mxu0 0.0
        %361 = vmatpush1.msra.mxu0 0.0
        %362 = vmatprep.mubr.f32.mxu0 0.0
        %363 = vmatmul.mubr.f32.gmra.mrb[0].mxu0 %v290
        %v364 = vpop.f32.mrb[0].mxu0
        %v365 = vadd.f32 0.0, %v364
        %v366 = vpop.f32.mrb[0].mxu0
        %v367 = vadd.f32 0.0, %v366
        %368 = vdwg.mxu0
        %369 = vmatprep.subr.mxu0 0.0
        %370 = vmatpush1.msra.mxu0 %v277
        %371 = vmatprep.subr.mxu0 0.0
        %372 = vmatpush1.msra.mxu0 %v280
        %373 = vmatprep.subr.mxu0 0.0
        %374 = vmatpush1.msra.mxu0 %v283
        %375 = vmatprep.subr.mxu0 0.0
        %376 = vmatpush1.msra.mxu0 %v286
        %377 = vmatprep.subr.mxu0 0.0
        %378 = vmatpush1.msra.mxu0 %v296
        %379 = vmatprep.subr.mxu0 0.0
        %380 = vmatpush1.msra.mxu0 0.0
        %381 = vmatprep.subr.mxu0 0.0
        %382 = vmatpush1.msra.mxu0 0.0
        %383 = vmatprep.subr.mxu0 0.0
        %384 = vmatpush1.msra.mxu0 0.0
        %385 = vmatprep.subr.mxu0 0.0
        %386 = vmatpush1.msra.mxu0 0.0
        %387 = vmatprep.subr.mxu0 0.0
        %388 = vmatpush1.msra.mxu0 0.0
        %389 = vmatprep.subr.mxu0 0.0
        %390 = vmatpush1.msra.mxu0 0.0
        %391 = vmatprep.subr.mxu0 0.0
        %392 = vmatpush1.msra.mxu0 0.0
        %393 = vmatprep.subr.mxu0 0.0
        %394 = vmatpush1.msra.mxu0 0.0
        %395 = vmatprep.subr.mxu0 0.0
        %396 = vmatpush1.msra.mxu0 0.0
        %397 = vmatprep.subr.mxu0 0.0
        %398 = vmatpush1.msra.mxu0 0.0
        %399 = vmatprep.subr.mxu0 0.0
        %400 = vmatpush1.msra.mxu0 0.0
        %401 = vmatprep.subr.mxu0 0.0
        %402 = vmatpush1.msra.mxu0 0.0
        %403 = vmatprep.subr.mxu0 0.0
        %404 = vmatpush1.msra.mxu0 0.0
        %405 = vmatprep.subr.mxu0 0.0
        %406 = vmatpush1.msra.mxu0 0.0
        %407 = vmatprep.subr.mxu0 0.0
        %408 = vmatpush1.msra.mxu0 0.0
        %409 = vmatprep.subr.mxu0 0.0
        %410 = vmatpush1.msra.mxu0 0.0
        %411 = vmatprep.subr.mxu0 0.0
        %412 = vmatpush1.msra.mxu0 0.0
        %413 = vmatprep.subr.mxu0 0.0
        %414 = vmatpush1.msra.mxu0 0.0
        %415 = vmatprep.subr.mxu0 0.0
        %416 = vmatpush1.msra.mxu0 0.0
        %417 = vmatprep.subr.mxu0 0.0
        %418 = vmatpush1.msra.mxu0 0.0
        %419 = vmatprep.subr.mxu0 0.0
        %420 = vmatpush1.msra.mxu0 0.0
        %421 = vmatprep.subr.mxu0 0.0
        %422 = vmatpush1.msra.mxu0 0.0
        %423 = vmatprep.subr.mxu0 0.0
        %424 = vmatpush1.msra.mxu0 0.0
        %425 = vmatprep.subr.mxu0 0.0
        %426 = vmatpush1.msra.mxu0 0.0
        %427 = vmatprep.subr.mxu0 0.0
        %428 = vmatpush1.msra.mxu0 0.0
        %429 = vmatprep.subr.mxu0 0.0
        %430 = vmatpush1.msra.mxu0 0.0
        %431 = vmatprep.subr.mxu0 0.0
        %432 = vmatpush1.msra.mxu0 0.0
        %433 = vmatprep.mubr.f32.mxu0 0.0
        %434 = vmatmul.mubr.f32.gmra.mrb[0].mxu0 %v290
        %v435 = vpop.f32.mrb[0].mxu0
        %v436 = vadd.f32 0.0, %v435
        %v437 = vpop.f32.mrb[0].mxu0
        %438 = vdwg.mxu0
        %439 = vst [vmem:[%s172] sm:$0xff] %v365
        %440 = vst [vmem:[%s172 + $0x8] sm:$0xff] %v367
        %vm441 = vcmask 261120
        %442 = vst.msk [vmem:[%s172 + $0x10] sm:$0xff] %vm441, %v436
        %s443 = sand.u32 %s75, 1
        %s444 = scalar_lea.sflag [#allocation4], %s443
        %s445 = sand.u32 %s75, 1
        %s446 = smul.addr %s445, 24
        %s447 = scalar_lea.vmem [#allocation7], %s446
        // Predicated region
        $region37: #{tpu_custom_call.1} parent=27 // pred_check
          %p448 = pneg %p85
        $region38: #{tpu_custom_call.1} parent=27 // pred_check_branch
          %450 = sbr.rel (%p448) target = $region40
        $region39: #{tpu_custom_call.1} parent=27 // pred_region
          %s452 = ssub.s32 384, 384
          %453 = vsyncadd %s444, %s452
          %s454 = smul.addr %s20, 3
          %s455 = smul.addr %s454, 128
          %s456 = scalar_lea.hbm %s2, %s455
          %s458 = sshll.u32 %s447, 4
          %s459 = int_to_ptr.vmem [resolvable:$true] %s458
          %461 = dma.vmem_to_hbm [thread:$0]  %s459, 384, %s456, %s444
        $region40: #{tpu_custom_call.1} parent=27 // pred_fallthru
          _
      $region28: #{tpu_custom_call.1} parent=5 // pred_fallthru
        _
      %p462 = scmp.le.s32.totalorder 2, %s15
      // Predicated region
      $region41: #{tpu_custom_call.1} parent=5 // pred_check
        %p463 = pneg %p462
      $region42: #{tpu_custom_call.1} parent=5 // pred_check_branch
        %465 = sbr.rel (%p463) target = $region44
      $region43: #{tpu_custom_call.1} parent=5 // pred_region
        %s466 = ssub.s32 %s15, 2
        // Predicated region
        $region45: #{tpu_custom_call.1} parent=43 // pred_check
          %p467 = pneg %p91
        $region46: #{tpu_custom_call.1} parent=43 // pred_check_branch
          %469 = sbr.rel (%p467) target = $region48
        $region47: #{tpu_custom_call.1} parent=43 // pred_region
          %s470 = sand.u32 %s76, 1
          %s471 = scalar_lea.sflag [#allocation4], %s470
          %s472 = sand.u32 %s76, 1
          %s473 = smul.addr %s472, 24
          %s474 = scalar_lea.vmem [#allocation7], %s473
          %475 = dma.done %s471, 384
        $region48: #{tpu_custom_call.1} parent=43 // pred_fallthru
          _
      $region44: #{tpu_custom_call.1} parent=5 // pred_fallthru
        _
    $region6: #{tpu_custom_call.1} parent=1 // loop_footer
      %s19 = sadd.s32 1, %s15
    $region7: #{tpu_custom_call.1} parent=1 // loop_footer_branch
      %14 = sbr.rel target = $region3
    $region8: #{tpu_custom_call.1} parent=1 // loop_exit
      _
    %476 = vsyncpa [#allocation3], 1
    %s477 = scalar_lea.sflag [#allocation3], 1
    %478 = vsyncpa %s477, 1
    %479 = vsyncpa [#allocation6], 1
    %480 = vsyncpa [#allocation4], 1
    %s481 = scalar_lea.sflag [#allocation4], 1
    %482 = vsyncpa %s481, 1

</llo_original>
